<compile_context>
chip_gen: v5e
topology: v5e:2x2
jax: 0.10.0
libtpu: 0.0.40
codegen_flags: <defaults>
</compile_context>

<pallas_src>
import jax
import jax.numpy as jnp
from jax.experimental import pallas as pl
from jax.experimental.pallas import tpu as pltpu


def _policy_net_kernel(x_ref, w1_ref, b1_ref, w2_ref, b2_ref, w3_ref, b3_ref,
                       out_ref):
    """One batch-tile of the PolicyNet forward pass (compact output slab)."""
    x = x_ref[...]                                            # (TM, n_in)

    # Hidden layer 1: Linear + Tanh   (MXU matmul, f32 accumulate; tanh -> EUP)
    h1 = jnp.tanh(
        jnp.dot(x, w1_ref[...], preferred_element_type=jnp.float32)
        + b1_ref[...])                                        # (TM, H)

    # Hidden layer 2: Linear + Tanh
    h2 = jnp.tanh(
        jnp.dot(h1, w2_ref[...], preferred_element_type=jnp.float32)
        + b2_ref[...])                                        # (TM, H)

    # Output layer: Linear(hidden, out_pad)   (out_pad = 2*n_outputs padded to 128*k)
    pred = (jnp.dot(h2, w3_ref[...], preferred_element_type=jnp.float32)
            + b3_ref[...])                                    # (TM, out_pad)

    # Only the first out_lanes columns are real; store a compact slab so the
    # HBM writeback is ~16x smaller than a 128-wide f32 slab.
    out_lanes = out_ref.shape[-1]
    p = pred[:, :out_lanes]                                   # (TM, out_lanes)

    # softplus (numerically stable, matches torch.nn.functional.softplus with
    # its default threshold=20 behaviour) then clip_beta "+ 1.0".
    sp = jnp.where(p > 20.0, p,
                   jnp.log1p(jnp.exp(jnp.minimum(p, 20.0))))
    out_ref[...] = sp + 1.0


def policy_net_forward(states, params, *, n_outputs, tm=None, max_tile=4096):
    """Run the PolicyNet forward pass; returns (alpha, beta) of the Beta dist.

    states: (N, n_inputs) float32 (any N; no wrapper-side batch padding).
    params: dict with w1 (n_in,H), b1 (1,H), w2 (H,H), b2 (1,H),
            w3 (H, 2*n_outputs), b3 (1, 2*n_outputs).
    """
    n, n_in = states.shape
    h = params["w1"].shape[1]
    out_w = 2 * n_outputs

    # --- MXU-friendly final layer: pad W3/b3 columns to a 128 multiple (tiny).
    out_pad = pl.cdiv(out_w, 128) * 128
    w3 = params["w3"]
    b3 = params["b3"]
    if out_pad != out_w:
        w3 = jnp.pad(w3, ((0, 0), (0, out_pad - out_w)))
        b3 = jnp.pad(b3, ((0, 0), (0, out_pad - out_w)))

    # --- compact HBM writeback: keep ceil(out_w/8)*8 (>= 8) lanes only.
    out_lanes = max(8, pl.cdiv(out_w, 8) * 8)

    # --- batch tiling: no padding of `states`; grid = cdiv(n, tm) and the
    #     final partial block is masked on writeback by Pallas.
    if tm is None:
        if n <= 1024:
            tm = n                                     # single step, block == full dims
        else:
            # >= 2 "parallel" grid steps (keeps both v7x TensorCores busy);
            # up to max_tile rows per step to amortize per-step overhead.
            tm = min(max_tile, pl.cdiv(pl.cdiv(n, 2), 128) * 128)
    else:
        tm = int(tm)
        if tm >= n:
            tm = n                                     # single step
        else:
            tm = max(8, (tm // 8) * 8)                 # sublane-aligned partial blocks
    grid = (pl.cdiv(n, tm),)

    # Weights/biases: one whole-array block, constant index map (DMA'd once;
    # Pallas skips re-copies when the block index does not change).
    full = lambda shape: pl.BlockSpec(shape, lambda i: (0, 0))

    cost = pl.CostEstimate(
        flops=2 * n * (n_in * h + h * h + h * out_w),
        transcendentals=n * (2 * h + 2 * out_w),
        bytes_accessed=4 * (n * (n_in + out_lanes)
                            + n_in * h + h + h * h + h + h * out_w + out_w),
    )

    conc = pl.pallas_call(
        _policy_net_kernel,
        out_shape=jax.ShapeDtypeStruct((n, out_lanes), jnp.float32),
        grid_spec=pltpu.PrefetchScalarGridSpec(
            num_scalar_prefetch=0,
            grid=grid,
            in_specs=[
                pl.BlockSpec((tm, n_in), lambda i: (i, 0)),     # states tile
                full((n_in, h)),                                # W1
                full((1, h)),                                   # b1
                full((h, h)),                                   # W2
                full((1, h)),                                   # b2
                full((h, out_pad)),                             # W3 (padded)
                full((1, out_pad)),                             # b3 (padded)
            ],
            out_specs=pl.BlockSpec((tm, out_lanes), lambda i: (i, 0)),
        ),
        compiler_params=pltpu.CompilerParams(
            dimension_semantics=("parallel",),
            vmem_limit_bytes=32 * 1024 * 1024),
        cost_estimate=cost,
    )(states, params["w1"], params["b1"], params["w2"], params["b2"], w3, b3)

    # Tiny XLA slices on the compact (n, out_lanes) slab.
    alpha = conc[:, :n_outputs]
    beta = conc[:, n_outputs:out_w]
    return alpha, beta


def init_params(key, n_inputs, hidden, n_outputs):
    """Deterministic init mirroring torch.nn.Linear (uniform +-1/sqrt(fan_in))."""
    ks = jax.random.split(key, 6)

    def linear(kw, kb, fan_in, fan_out):
        bound = 1.0 / jnp.sqrt(jnp.float32(fan_in))
        w = jax.random.uniform(kw, (fan_in, fan_out), jnp.float32, -bound, bound)
        b = jax.random.uniform(kb, (1, fan_out), jnp.float32, -bound, bound)
        return w, b

    w1, b1 = linear(ks[0], ks[1], n_inputs, hidden)
    w2, b2 = linear(ks[2], ks[3], hidden, hidden)
    w3, b3 = linear(ks[4], ks[5], hidden, 2 * n_outputs)
    return {"w1": w1, "b1": b1, "w2": w2, "b2": b2, "w3": w3, "b3": b3}


def _reference(states, p, n_outputs):
    h1 = jnp.tanh(states @ p["w1"] + p["b1"])
    h2 = jnp.tanh(h1 @ p["w2"] + p["b2"])
    pred = h2 @ p["w3"] + p["b3"]
    conc = jax.nn.softplus(pred) + 1.0
    return conc[:, :n_outputs], conc[:, n_outputs:]


if __name__ == "__main__":
    N, N_INPUTS, HIDDEN, N_OUTPUTS = 64, 16, 32, 1

    key = jax.random.PRNGKey(0)
    k_states, k_params, k_big = jax.random.split(key, 3)
    states = jax.random.normal(k_states, (N, N_INPUTS), dtype=jnp.float32)
    params = init_params(k_params, N_INPUTS, HIDDEN, N_OUTPUTS)

    alpha, beta = policy_net_forward(states, params, n_outputs=N_OUTPUTS)
    jax.block_until_ready((alpha, beta))

    # Sanity check against a pure-JAX reference of the same forward pass.
    ref_a, ref_b = _reference(states, params, N_OUTPUTS)
    assert alpha.shape == (N, N_OUTPUTS) and beta.shape == (N, N_OUTPUTS)
    assert jnp.allclose(alpha, ref_a, atol=1e-5, rtol=1e-5)
    assert jnp.allclose(beta, ref_b, atol=1e-5, rtol=1e-5)
    # Beta concentrations must be >= 1 because clip_beta=True adds 1 after softplus.
    assert bool(jnp.all(alpha >= 1.0)) and bool(jnp.all(beta >= 1.0))

    # Multi-tile path with an explicit small tile and a masked partial last block.
    a2, b2_ = policy_net_forward(states[:50], params, n_outputs=N_OUTPUTS, tm=16)
    jax.block_until_ready((a2, b2_))
    assert jnp.allclose(a2, ref_a[:50], atol=1e-5, rtol=1e-5)
    assert jnp.allclose(b2_, ref_b[:50], atol=1e-5, rtol=1e-5)

    # Large-batch auto path: >= 2 "parallel" grid steps + masked partial block.
    big = jax.random.normal(k_big, (3000, N_INPUTS), dtype=jnp.float32)
    a3, b3_ = policy_net_forward(big, params, n_outputs=N_OUTPUTS)
    jax.block_until_ready((a3, b3_))
    r3a, r3b = _reference(big, params, N_OUTPUTS)
    assert jnp.allclose(a3, r3a, atol=1e-5, rtol=1e-5)
    assert jnp.allclose(b3_, r3b, atol=1e-5, rtol=1e-5)

    # TODO(synk): torch.distributions.Beta object (sampling / log_prob /
    # entropy) is not reproduced in-kernel; the kernel emits its
    # concentration parameters (alpha, beta).
    print("KERNEL_OK")
</pallas_src>

<mosaic_0001>
module attributes {stable_mosaic.version = 11 : i64} {
  func.func @_policy_net_kernel(%arg0: i32, %arg1: memref<64x16xf32, #tpu.memory_space<vmem>>, %arg2: memref<16x32xf32, #tpu.memory_space<vmem>>, %arg3: memref<1x32xf32, #tpu.memory_space<vmem>>, %arg4: memref<32x32xf32, #tpu.memory_space<vmem>>, %arg5: memref<1x32xf32, #tpu.memory_space<vmem>>, %arg6: memref<32x128xf32, #tpu.memory_space<vmem>>, %arg7: memref<1x128xf32, #tpu.memory_space<vmem>>, %arg8: memref<64x8xf32, #tpu.memory_space<vmem>>) attributes {dimension_semantics = [#tpu.dimension_semantics<parallel>], iteration_bounds = array<i64: 1>, scalar_prefetch = 0 : i64, scratch_operands = 0 : i64, tpu.core_type = #tpu.core_type<tc>, window_params = [{transform_indices = @transform_0, window_bounds = array<i64: 64, 16>}, {pipeline_mode = #tpu.pipeline_mode<synchronous>, transform_indices = @transform_1, window_bounds = array<i64: 16, 32>}, {pipeline_mode = #tpu.pipeline_mode<synchronous>, transform_indices = @transform_2, window_bounds = array<i64: 1, 32>}, {pipeline_mode = #tpu.pipeline_mode<synchronous>, transform_indices = @transform_3, window_bounds = array<i64: 32, 32>}, {pipeline_mode = #tpu.pipeline_mode<synchronous>, transform_indices = @transform_4, window_bounds = array<i64: 1, 32>}, {pipeline_mode = #tpu.pipeline_mode<synchronous>, transform_indices = @transform_5, window_bounds = array<i64: 32, 128>}, {pipeline_mode = #tpu.pipeline_mode<synchronous>, transform_indices = @transform_6, window_bounds = array<i64: 1, 128>}, {transform_indices = @transform_7, window_bounds = array<i64: 64, 8>}]} {
    %c0 = arith.constant 0 : index
    %c0_0 = arith.constant 0 : index
    %0 = vector.load %arg1[%c0, %c0_0] : memref<64x16xf32, #tpu.memory_space<vmem>>, vector<64x16xf32>
    %c0_1 = arith.constant 0 : index
    %c0_2 = arith.constant 0 : index
    %1 = vector.load %arg2[%c0_1, %c0_2] : memref<16x32xf32, #tpu.memory_space<vmem>>, vector<16x32xf32>
    %cst = arith.constant dense<0.000000e+00> : vector<64x32xf32>
    %2 = tpu.matmul %0, %1, %cst {dimension_numbers = #tpu.dot_dimension_numbers<[1], [0], [0], [1], [0, 0, 1, 1], [], []>} : vector<64x16xf32>, vector<16x32xf32>, vector<64x32xf32> -> vector<64x32xf32>
    %c0_3 = arith.constant 0 : index
    %c0_4 = arith.constant 0 : index
    %3 = vector.load %arg3[%c0_3, %c0_4] : memref<1x32xf32, #tpu.memory_space<vmem>>, vector<1x32xf32>
    %4 = vector.broadcast %3 : vector<1x32xf32> to vector<64x32xf32>
    %5 = arith.addf %2, %4 : vector<64x32xf32>
    %6 = math.tanh %5 : vector<64x32xf32>
    %c0_5 = arith.constant 0 : index
    %c0_6 = arith.constant 0 : index
    %7 = vector.load %arg4[%c0_5, %c0_6] : memref<32x32xf32, #tpu.memory_space<vmem>>, vector<32x32xf32>
    %cst_7 = arith.constant dense<0.000000e+00> : vector<64x32xf32>
    %8 = tpu.matmul %6, %7, %cst_7 {dimension_numbers = #tpu.dot_dimension_numbers<[1], [0], [0], [1], [0, 0, 1, 1], [], []>} : vector<64x32xf32>, vector<32x32xf32>, vector<64x32xf32> -> vector<64x32xf32>
    %c0_8 = arith.constant 0 : index
    %c0_9 = arith.constant 0 : index
    %9 = vector.load %arg5[%c0_8, %c0_9] : memref<1x32xf32, #tpu.memory_space<vmem>>, vector<1x32xf32>
    %10 = vector.broadcast %9 : vector<1x32xf32> to vector<64x32xf32>
    %11 = arith.addf %8, %10 : vector<64x32xf32>
    %12 = math.tanh %11 : vector<64x32xf32>
    %c0_10 = arith.constant 0 : index
    %c0_11 = arith.constant 0 : index
    %13 = vector.load %arg6[%c0_10, %c0_11] : memref<32x128xf32, #tpu.memory_space<vmem>>, vector<32x128xf32>
    %cst_12 = arith.constant dense<0.000000e+00> : vector<64x128xf32>
    %14 = tpu.matmul %12, %13, %cst_12 {dimension_numbers = #tpu.dot_dimension_numbers<[1], [0], [0], [1], [0, 0, 1, 1], [], []>} : vector<64x32xf32>, vector<32x128xf32>, vector<64x128xf32> -> vector<64x128xf32>
    %c0_13 = arith.constant 0 : index
    %c0_14 = arith.constant 0 : index
    %15 = vector.load %arg7[%c0_13, %c0_14] : memref<1x128xf32, #tpu.memory_space<vmem>>, vector<1x128xf32>
    %16 = vector.broadcast %15 : vector<1x128xf32> to vector<64x128xf32>
    %17 = arith.addf %14, %16 : vector<64x128xf32>
    %18 = vector.extract_strided_slice %17 {offsets = [0, 0], sizes = [64, 8], strides = [1, 1]} : vector<64x128xf32> to vector<64x8xf32>
    %cst_15 = arith.constant 2.000000e+01 : f32
    %19 = vector.broadcast %cst_15 : f32 to vector<64x8xf32>
    %20 = arith.cmpf ogt, %18, %19 : vector<64x8xf32>
    %cst_16 = arith.constant 2.000000e+01 : f32
    %21 = vector.broadcast %cst_16 : f32 to vector<64x8xf32>
    %22 = arith.minimumf %18, %21 : vector<64x8xf32>
    %23 = math.exp %22 : vector<64x8xf32>
    %24 = math.log1p %23 : vector<64x8xf32>
    %25 = arith.select %20, %18, %24 : vector<64x8xi1>, vector<64x8xf32>
    %cst_17 = arith.constant 1.000000e+00 : f32
    %26 = vector.broadcast %cst_17 : f32 to vector<64x8xf32>
    %27 = arith.addf %25, %26 : vector<64x8xf32>
    %c0_18 = arith.constant 0 : index
    %c0_19 = arith.constant 0 : index
    %28 = vector.load %arg8[%c0_18, %c0_19] : memref<64x8xf32, #tpu.memory_space<vmem>>, vector<64x8xf32>
    tpu.vector_store %arg8[%c0_18, %c0_19], %27 {strides = array<i32>} : memref<64x8xf32, #tpu.memory_space<vmem>>, vector<64x8xf32>,
    return
  }
  func.func @transform_0(%arg0: i32) -> (i32, i32) {
    %c0_i32 = arith.constant 0 : i32
    %c0_i32_0 = arith.constant 0 : i32
    return %arg0, %c0_i32 : i32, i32
  }
  func.func @transform_1(%arg0: i32) -> (i32, i32) {
    %c0_i32 = arith.constant 0 : i32
    %c0_i32_0 = arith.constant 0 : i32
    %c0_i32_1 = arith.constant 0 : i32
    return %c0_i32, %c0_i32_0 : i32, i32
  }
  func.func @transform_2(%arg0: i32) -> (i32, i32) {
    %c0_i32 = arith.constant 0 : i32
    %c0_i32_0 = arith.constant 0 : i32
    %c0_i32_1 = arith.constant 0 : i32
    return %c0_i32, %c0_i32_0 : i32, i32
  }
  func.func @transform_3(%arg0: i32) -> (i32, i32) {
    %c0_i32 = arith.constant 0 : i32
    %c0_i32_0 = arith.constant 0 : i32
    %c0_i32_1 = arith.constant 0 : i32
    return %c0_i32, %c0_i32_0 : i32, i32
  }
  func.func @transform_4(%arg0: i32) -> (i32, i32) {
    %c0_i32 = arith.constant 0 : i32
    %c0_i32_0 = arith.constant 0 : i32
    %c0_i32_1 = arith.constant 0 : i32
    return %c0_i32, %c0_i32_0 : i32, i32
  }
  func.func @transform_5(%arg0: i32) -> (i32, i32) {
    %c0_i32 = arith.constant 0 : i32
    %c0_i32_0 = arith.constant 0 : i32
    %c0_i32_1 = arith.constant 0 : i32
    return %c0_i32, %c0_i32_0 : i32, i32
  }
  func.func @transform_6(%arg0: i32) -> (i32, i32) {
    %c0_i32 = arith.constant 0 : i32
    %c0_i32_0 = arith.constant 0 : i32
    %c0_i32_1 = arith.constant 0 : i32
    return %c0_i32, %c0_i32_0 : i32, i32
  }
  func.func @transform_7(%arg0: i32) -> (i32, i32) {
    %c0_i32 = arith.constant 0 : i32
    %c0_i32_0 = arith.constant 0 : i32
    return %arg0, %c0_i32 : i32, i32
  }
}

</mosaic_0001>

<llo_original>
// kernel: tpu_custom_call.1
$region0: #{tpu_custom_call.1}
  #allocation0 [shape = 'u32[]', space=smem, size = 0x4, offset = 0x4, fixed_abs, tag = 'smem constant byte address 0x4 - core index']
  #allocation1 [shape = 'u32[72,128]{1,0:T(1,128)}', space=vmem, size = 0x9000, scoped, tag = 'internal scratch']
  %s0 = inlined_call_operand.vmem [shape: f32[64,16], index: 0, kind: input, shape index: {}]
  %s1 = inlined_call_operand.vmem [shape: f32[16,32], index: 1, kind: input, shape index: {}]
  %s2 = inlined_call_operand.vmem [shape: f32[1,32], index: 2, kind: input, shape index: {}]
  %s3 = inlined_call_operand.vmem [shape: f32[32,32], index: 3, kind: input, shape index: {}]
  %s4 = inlined_call_operand.vmem [shape: f32[1,32], index: 4, kind: input, shape index: {}]
  %s5 = inlined_call_operand.vmem [shape: f32[32,128], index: 5, kind: input, shape index: {}]
  %s6 = inlined_call_operand.vmem [shape: f32[1,128], index: 6, kind: input, shape index: {}]
  %s7 = inlined_call_operand.vmem [shape: f32[64,8], index: 7, kind: output, shape index: {}]
  %s8 = sld [smem:[#allocation0]]
  $region38: #{tpu_custom_call.1} parent=0
    _
  %s10 = ssub.s32 1, %s8
  %s11 = scalar_select 0, %s10, %s8
  // Predicated region
  $region2: #{tpu_custom_call.1} parent=0 // pred_check
    _
  $region3: #{tpu_custom_call.1} parent=0 // pred_check_branch
    %13 = sbr.rel (0) target = $region5
  $region4: #{tpu_custom_call.1} parent=0 // pred_region
    _
  $region5: #{tpu_custom_call.1} parent=0 // pred_fallthru
    _
  // Predicated region
  $region6: #{tpu_custom_call.1} parent=0 // pred_check
    _
  $region7: #{tpu_custom_call.1} parent=0 // pred_check_branch
    %15 = sbr.rel (0) target = $region9
  $region8: #{tpu_custom_call.1} parent=0 // pred_region
    _
  $region9: #{tpu_custom_call.1} parent=0 // pred_fallthru
    _
  // Predicated region
  $region10: #{tpu_custom_call.1} parent=0 // pred_check
    _
  $region11: #{tpu_custom_call.1} parent=0 // pred_check_branch
    %17 = sbr.rel (0) target = $region13
  $region12: #{tpu_custom_call.1} parent=0 // pred_region
    _
  $region13: #{tpu_custom_call.1} parent=0 // pred_fallthru
    _
  // Predicated region
  $region14: #{tpu_custom_call.1} parent=0 // pred_check
    _
  $region15: #{tpu_custom_call.1} parent=0 // pred_check_branch
    %19 = sbr.rel (0) target = $region17
  $region16: #{tpu_custom_call.1} parent=0 // pred_region
    _
  $region17: #{tpu_custom_call.1} parent=0 // pred_fallthru
    _
  // Predicated region
  $region18: #{tpu_custom_call.1} parent=0 // pred_check
    _
  $region19: #{tpu_custom_call.1} parent=0 // pred_check_branch
    %21 = sbr.rel (0) target = $region21
  $region20: #{tpu_custom_call.1} parent=0 // pred_region
    _
  $region21: #{tpu_custom_call.1} parent=0 // pred_fallthru
    _
  // Predicated region
  $region22: #{tpu_custom_call.1} parent=0 // pred_check
    _
  $region23: #{tpu_custom_call.1} parent=0 // pred_check_branch
    %23 = sbr.rel (0) target = $region25
  $region24: #{tpu_custom_call.1} parent=0 // pred_region
    _
  $region25: #{tpu_custom_call.1} parent=0 // pred_fallthru
    _
  // Predicated region
  $region26: #{tpu_custom_call.1} parent=0 // pred_check
    _
  $region27: #{tpu_custom_call.1} parent=0 // pred_check_branch
    %25 = sbr.rel (0) target = $region29
  $region28: #{tpu_custom_call.1} parent=0 // pred_region
    _
  $region29: #{tpu_custom_call.1} parent=0 // pred_fallthru
    _
  %v26 = vld [vmem:[%s0] sm:$0xff]
  %v27 = vld [vmem:[%s0 + $0x8] sm:$0xff]
  %v28 = vld [vmem:[%s0 + $0x10] sm:$0xff]
  %v29 = vld [vmem:[%s0 + $0x18] sm:$0xff]
  %v30 = vld [vmem:[%s0 + $0x20] sm:$0xff]
  %v31 = vld [vmem:[%s0 + $0x28] sm:$0xff]
  %v32 = vld [vmem:[%s0 + $0x30] sm:$0xff]
  %v33 = vld [vmem:[%s0 + $0x38] sm:$0xff]
  %v34 = vld [vmem:[%s1] sm:$0xff]
  %v35 = vld [vmem:[%s1 + $0x8] sm:$0xff]
  %v36 = vld [vmem:[%s2] sm:$0x1]
  %v38 = vperm.slane %v36, 0
  %vm40 = vcmask 130048
  %v42 = vsel %vm40, %v26, 0
  %v45 = vsel %vm40, %v27, 0
  %v48 = vsel %vm40, %v28, 0
  %v51 = vsel %vm40, %v29, 0
  %v54 = vsel %vm40, %v30, 0
  %v57 = vsel %vm40, %v31, 0
  %v60 = vsel %vm40, %v32, 0
  %v63 = vsel %vm40, %v33, 0
  %65 = vmatpush.msra.mxu0 0.0
  %66 = vmatpush.msra.mxu0 0.0
  %67 = vmatpush.msra.mxu0 0.0
  %68 = vmatpush.msra.mxu0 0.0
  %69 = vmatpush.msra.mxu0 0.0
  %70 = vmatpush.msra.mxu0 0.0
  %71 = vmatpush.msra.mxu0 0.0
  %72 = vmatpush.msra.mxu0 0.0
  %73 = vmatpush.msra.mxu0 0.0
  %74 = vmatpush.msra.mxu0 0.0
  %75 = vmatpush.msra.mxu0 0.0
  %76 = vmatpush.msra.mxu0 0.0
  %77 = vmatpush.msra.mxu0 0.0
  %78 = vmatpush.msra.mxu0 0.0
  %79 = vmatpush.msra.mxu0 %v35
  %80 = vmatpush.msra.mxu0 %v34
  %81 = vmatmul.f32.gmra.mxu0 %v42
  %v82 = vpop.f32.mrf.mxu0
  %v83 = vadd.f32 %v38, %v82
  %84 = vmatmul.f32.gmra.mxu0 %v45
  %v85 = vpop.f32.mrf.mxu0
  %v86 = vadd.f32 %v38, %v85
  %87 = vmatmul.f32.gmra.mxu0 %v48
  %v88 = vpop.f32.mrf.mxu0
  %v89 = vadd.f32 %v38, %v88
  %90 = vmatmul.f32.gmra.mxu0 %v51
  %v91 = vpop.f32.mrf.mxu0
  %v92 = vadd.f32 %v38, %v91
  %93 = vmatmul.f32.gmra.mxu0 %v54
  %v94 = vpop.f32.mrf.mxu0
  %v95 = vadd.f32 %v38, %v94
  %96 = vmatmul.f32.gmra.mxu0 %v57
  %v97 = vpop.f32.mrf.mxu0
  %v98 = vadd.f32 %v38, %v97
  %99 = vmatmul.f32.gmra.mxu0 %v60
  %v100 = vpop.f32.mrf.mxu0
  %v101 = vadd.f32 %v38, %v100
  %102 = vmatmul.f32.gmra.mxu0 %v63
  %v103 = vpop.f32.mrf.mxu0
  %v104 = vadd.f32 %v38, %v103
  %105 = vdwg.mxu0
  %v106 = vtanh.pop %v83
  %v107 = vtanh.pop %v86
  %v108 = vtanh.pop %v89
  %v109 = vtanh.pop %v92
  %v110 = vtanh.pop %v95
  %v111 = vtanh.pop %v98
  %v112 = vtanh.pop %v101
  %v113 = vtanh.pop %v104
  %v114 = vld [vmem:[%s3] sm:$0xff]
  %v115 = vld [vmem:[%s3 + $0x8] sm:$0xff]
  %v116 = vld [vmem:[%s3 + $0x10] sm:$0xff]
  %v117 = vld [vmem:[%s3 + $0x18] sm:$0xff]
  %v118 = vld [vmem:[%s4] sm:$0x1]
  %v120 = vperm.slane %v118, 0
  %vm122 = vcmask 261120
  %v124 = vsel %vm122, %v106, 0
  %v127 = vsel %vm122, %v107, 0
  %v130 = vsel %vm122, %v108, 0
  %v133 = vsel %vm122, %v109, 0
  %v136 = vsel %vm122, %v110, 0
  %v139 = vsel %vm122, %v111, 0
  %v142 = vsel %vm122, %v112, 0
  %v145 = vsel %vm122, %v113, 0
  %147 = vmatpush.msra.mxu0 0.0
  %148 = vmatpush.msra.mxu0 0.0
  %149 = vmatpush.msra.mxu0 0.0
  %150 = vmatpush.msra.mxu0 0.0
  %151 = vmatpush.msra.mxu0 0.0
  %152 = vmatpush.msra.mxu0 0.0
  %153 = vmatpush.msra.mxu0 0.0
  %154 = vmatpush.msra.mxu0 0.0
  %155 = vmatpush.msra.mxu0 0.0
  %156 = vmatpush.msra.mxu0 0.0
  %157 = vmatpush.msra.mxu0 0.0
  %158 = vmatpush.msra.mxu0 0.0
  %159 = vmatpush.msra.mxu0 %v117
  %160 = vmatpush.msra.mxu0 %v116
  %161 = vmatpush.msra.mxu0 %v115
  %162 = vmatpush.msra.mxu0 %v114
  %163 = vmatmul.f32.gmra.mxu0 %v124
  %v164 = vpop.f32.mrf.mxu0
  %v165 = vadd.f32 %v120, %v164
  %166 = vmatmul.f32.gmra.mxu0 %v127
  %v167 = vpop.f32.mrf.mxu0
  %v168 = vadd.f32 %v120, %v167
  %169 = vmatmul.f32.gmra.mxu0 %v130
  %v170 = vpop.f32.mrf.mxu0
  %v171 = vadd.f32 %v120, %v170
  %172 = vmatmul.f32.gmra.mxu0 %v133
  %v173 = vpop.f32.mrf.mxu0
  %v174 = vadd.f32 %v120, %v173
  %175 = vmatmul.f32.gmra.mxu0 %v136
  %v176 = vpop.f32.mrf.mxu0
  %v177 = vadd.f32 %v120, %v176
  %178 = vmatmul.f32.gmra.mxu0 %v139
  %v179 = vpop.f32.mrf.mxu0
  %v180 = vadd.f32 %v120, %v179
  %181 = vmatmul.f32.gmra.mxu0 %v142
  %v182 = vpop.f32.mrf.mxu0
  %v183 = vadd.f32 %v120, %v182
  %184 = vmatmul.f32.gmra.mxu0 %v145
  %v185 = vpop.f32.mrf.mxu0
  %v186 = vadd.f32 %v120, %v185
  %187 = vdwg.mxu0
  %v188 = vtanh.pop %v165
  %v189 = vtanh.pop %v168
  %v190 = vtanh.pop %v171
  %v191 = vtanh.pop %v174
  %v192 = vtanh.pop %v177
  %v193 = vtanh.pop %v180
  %v194 = vtanh.pop %v183
  %v195 = vtanh.pop %v186
  %v196 = vld [vmem:[%s5] sm:$0xff]
  %v197 = vld [vmem:[%s5 + $0x8] sm:$0xff]
  %v198 = vld [vmem:[%s5 + $0x10] sm:$0xff]
  %v199 = vld [vmem:[%s5 + $0x18] sm:$0xff]
  %v200 = vld [vmem:[%s6] sm:$0x1]
  %v202 = vperm.slane %v200, 0
  %v205 = vsel %vm122, %v188, 0
  %v208 = vsel %vm122, %v189, 0
  %v211 = vsel %vm122, %v190, 0
  %v214 = vsel %vm122, %v191, 0
  %v217 = vsel %vm122, %v192, 0
  %v220 = vsel %vm122, %v193, 0
  %v223 = vsel %vm122, %v194, 0
  %v226 = vsel %vm122, %v195, 0
  %228 = vmatpush.msra.mxu0 0.0
  %229 = vmatpush.msra.mxu0 0.0
  %230 = vmatpush.msra.mxu0 0.0
  %231 = vmatpush.msra.mxu0 0.0
  %232 = vmatpush.msra.mxu0 0.0
  %233 = vmatpush.msra.mxu0 0.0
  %234 = vmatpush.msra.mxu0 0.0
  %235 = vmatpush.msra.mxu0 0.0
  %236 = vmatpush.msra.mxu0 0.0
  %237 = vmatpush.msra.mxu0 0.0
  %238 = vmatpush.msra.mxu0 0.0
  %239 = vmatpush.msra.mxu0 0.0
  %240 = vmatpush.msra.mxu0 %v199
  %241 = vmatpush.msra.mxu0 %v198
  %242 = vmatpush.msra.mxu0 %v197
  %243 = vmatpush.msra.mxu0 %v196
  %244 = vmatmul.f32.gmra.mxu0 %v205
  %v245 = vpop.f32.mrf.mxu0
  %v246 = vadd.f32 %v202, %v245
  %247 = vmatmul.f32.gmra.mxu0 %v208
  %v248 = vpop.f32.mrf.mxu0
  %v249 = vadd.f32 %v202, %v248
  %250 = vmatmul.f32.gmra.mxu0 %v211
  %v251 = vpop.f32.mrf.mxu0
  %v252 = vadd.f32 %v202, %v251
  %253 = vmatmul.f32.gmra.mxu0 %v214
  %v254 = vpop.f32.mrf.mxu0
  %v255 = vadd.f32 %v202, %v254
  %256 = vmatmul.f32.gmra.mxu0 %v217
  %v257 = vpop.f32.mrf.mxu0
  %v258 = vadd.f32 %v202, %v257
  %259 = vmatmul.f32.gmra.mxu0 %v220
  %v260 = vpop.f32.mrf.mxu0
  %v261 = vadd.f32 %v202, %v260
  %262 = vmatmul.f32.gmra.mxu0 %v223
  %v263 = vpop.f32.mrf.mxu0
  %v264 = vadd.f32 %v202, %v263
  %265 = vmatmul.f32.gmra.mxu0 %v226
  %v266 = vpop.f32.mrf.mxu0
  %v267 = vadd.f32 %v202, %v266
  %268 = vdwg.mxu0
  %vm269 = vcmp.gt.f32.partialorder %v246, 20.0
  %vm270 = vcmp.gt.f32.partialorder %v249, 20.0
  %vm271 = vcmp.gt.f32.partialorder %v252, 20.0
  %vm272 = vcmp.gt.f32.partialorder %v255, 20.0
  %vm273 = vcmp.gt.f32.partialorder %v258, 20.0
  %vm274 = vcmp.gt.f32.partialorder %v261, 20.0
  %vm275 = vcmp.gt.f32.partialorder %v264, 20.0
  %vm276 = vcmp.gt.f32.partialorder %v267, 20.0
  %v277 = vmin.f32 %v246, 20.0
  %v278 = vmin.f32 %v249, 20.0
  %v279 = vmin.f32 %v252, 20.0
  %v280 = vmin.f32 %v255, 20.0
  %v281 = vmin.f32 %v258, 20.0
  %v282 = vmin.f32 %v261, 20.0
  %v283 = vmin.f32 %v264, 20.0
  %v284 = vmin.f32 %v267, 20.0
  %v285 = vmul.f32 %v277, 1.442695
  %v286 = vpow.pop %v285
  %v287 = vmul.f32 %v278, 1.442695
  %v288 = vpow.pop %v287
  %v289 = vmul.f32 %v279, 1.442695
  %v290 = vpow.pop %v289
  %v291 = vmul.f32 %v280, 1.442695
  %v292 = vpow.pop %v291
  %v293 = vmul.f32 %v281, 1.442695
  %v294 = vpow.pop %v293
  %v295 = vmul.f32 %v282, 1.442695
  %v296 = vpow.pop %v295
  %v297 = vmul.f32 %v283, 1.442695
  %v298 = vpow.pop %v297
  %v299 = vmul.f32 %v284, 1.442695
  %v300 = vpow.pop %v299
  %v301 = vadd.f32 %v286, 1.0
  %v302 = vlog2.pop %v301
  %v303 = vmul.f32 %v302, 0.6931472
  %v304 = vmul.f32 -0.5, %v286
  %v305 = vadd.f32 %v304, 1.0
  %v306 = vmul.f32 %v305, %v286
  %v307 = vand.u32 2147483647, %v286
  %vm308 = vcmp.lt.f32.partialorder %v307, 0.0004427343
  %v309 = vsel %vm308, %v306, %v303
  %v310 = vadd.f32 %v288, 1.0
  %v311 = vlog2.pop %v310
  %v312 = vmul.f32 %v311, 0.6931472
  %v313 = vmul.f32 -0.5, %v288
  %v314 = vadd.f32 %v313, 1.0
  %v315 = vmul.f32 %v314, %v288
  %v316 = vand.u32 2147483647, %v288
  %vm317 = vcmp.lt.f32.partialorder %v316, 0.0004427343
  %v318 = vsel %vm317, %v315, %v312
  %v319 = vadd.f32 %v290, 1.0
  %v320 = vlog2.pop %v319
  %v321 = vmul.f32 %v320, 0.6931472
  %v322 = vmul.f32 -0.5, %v290
  %v323 = vadd.f32 %v322, 1.0
  %v324 = vmul.f32 %v323, %v290
  %v325 = vand.u32 2147483647, %v290
  %vm326 = vcmp.lt.f32.partialorder %v325, 0.0004427343
  %v327 = vsel %vm326, %v324, %v321
  %v328 = vadd.f32 %v292, 1.0
  %v329 = vlog2.pop %v328
  %v330 = vmul.f32 %v329, 0.6931472
  %v331 = vmul.f32 -0.5, %v292
  %v332 = vadd.f32 %v331, 1.0
  %v333 = vmul.f32 %v332, %v292
  %v334 = vand.u32 2147483647, %v292
  %vm335 = vcmp.lt.f32.partialorder %v334, 0.0004427343
  %v336 = vsel %vm335, %v333, %v330
  %v337 = vadd.f32 %v294, 1.0
  %v338 = vlog2.pop %v337
  %v339 = vmul.f32 %v338, 0.6931472
  %v340 = vmul.f32 -0.5, %v294
  %v341 = vadd.f32 %v340, 1.0
  %v342 = vmul.f32 %v341, %v294
  %v343 = vand.u32 2147483647, %v294
  %vm344 = vcmp.lt.f32.partialorder %v343, 0.0004427343
  %v345 = vsel %vm344, %v342, %v339
  %v346 = vadd.f32 %v296, 1.0
  %v347 = vlog2.pop %v346
  %v348 = vmul.f32 %v347, 0.6931472
  %v349 = vmul.f32 -0.5, %v296
  %v350 = vadd.f32 %v349, 1.0
  %v351 = vmul.f32 %v350, %v296
  %v352 = vand.u32 2147483647, %v296
  %vm353 = vcmp.lt.f32.partialorder %v352, 0.0004427343
  %v354 = vsel %vm353, %v351, %v348
  %v355 = vadd.f32 %v298, 1.0
  %v356 = vlog2.pop %v355
  %v357 = vmul.f32 %v356, 0.6931472
  %v358 = vmul.f32 -0.5, %v298
  %v359 = vadd.f32 %v358, 1.0
  %v360 = vmul.f32 %v359, %v298
  %v361 = vand.u32 2147483647, %v298
  %vm362 = vcmp.lt.f32.partialorder %v361, 0.0004427343
  %v363 = vsel %vm362, %v360, %v357
  %v364 = vadd.f32 %v300, 1.0
  %v365 = vlog2.pop %v364
  %v366 = vmul.f32 %v365, 0.6931472
  %v367 = vmul.f32 -0.5, %v300
  %v368 = vadd.f32 %v367, 1.0
  %v369 = vmul.f32 %v368, %v300
  %v370 = vand.u32 2147483647, %v300
  %vm371 = vcmp.lt.f32.partialorder %v370, 0.0004427343
  %v372 = vsel %vm371, %v369, %v366
  %v373 = vsel %vm269, %v246, %v309
  %v374 = vsel %vm270, %v249, %v318
  %v375 = vsel %vm271, %v252, %v327
  %v376 = vsel %vm272, %v255, %v336
  %v377 = vsel %vm273, %v258, %v345
  %v378 = vsel %vm274, %v261, %v354
  %v379 = vsel %vm275, %v264, %v363
  %v380 = vsel %vm276, %v267, %v372
  %v381 = vadd.f32 %v373, 1.0
  %v382 = vadd.f32 %v374, 1.0
  %v383 = vadd.f32 %v375, 1.0
  %v384 = vadd.f32 %v376, 1.0
  %v385 = vadd.f32 %v377, 1.0
  %v386 = vadd.f32 %v378, 1.0
  %v387 = vadd.f32 %v379, 1.0
  %v388 = vadd.f32 %v380, 1.0
  %vm389 = vcmask 64512
  %390 = vst.msk [vmem:[%s7] sm:$0xff] %vm389, %v381
  %391 = vst.msk [vmem:[%s7 + $0x8] sm:$0xff] %vm389, %v382
  %392 = vst.msk [vmem:[%s7 + $0x10] sm:$0xff] %vm389, %v383
  %393 = vst.msk [vmem:[%s7 + $0x18] sm:$0xff] %vm389, %v384
  %394 = vst.msk [vmem:[%s7 + $0x20] sm:$0xff] %vm389, %v385
  %395 = vst.msk [vmem:[%s7 + $0x28] sm:$0xff] %vm389, %v386
  %396 = vst.msk [vmem:[%s7 + $0x30] sm:$0xff] %vm389, %v387
  %397 = vst.msk [vmem:[%s7 + $0x38] sm:$0xff] %vm389, %v388
  // Predicated region
  $region30: #{tpu_custom_call.1} parent=0 // pred_check
    _
  $region31: #{tpu_custom_call.1} parent=0 // pred_check_branch
    %399 = sbr.rel (0) target = $region33
  $region32: #{tpu_custom_call.1} parent=0 // pred_region
    _
  $region33: #{tpu_custom_call.1} parent=0 // pred_fallthru
    _
  // Predicated region
  $region34: #{tpu_custom_call.1} parent=0 // pred_check
    _
  $region35: #{tpu_custom_call.1} parent=0 // pred_check_branch
    %401 = sbr.rel (0) target = $region37
  $region36: #{tpu_custom_call.1} parent=0 // pred_region
    _
  $region37: #{tpu_custom_call.1} parent=0 // pred_fallthru
    _

</llo_original>
